<compile_context>
chip_gen: v5e
topology: v5e:2x2
jax: 0.10.0
libtpu: 0.0.40
codegen_flags: <defaults>
</compile_context>

<pallas_src>
import jax
import jax.numpy as jnp
from jax.experimental import pallas as pl
from jax.experimental.pallas import tpu as pltpu


# ------------------------- model hyper-parameters -------------------------
BATCH = 2
SEQ = 8
INPUT_SIZE = 1
HIDDEN = 32
NUM_CLASSES = 56

IN_F = SEQ * INPUT_SIZE          # flattened input features (8)

# Row layout of the packed parameter slab (lane-padded to 128 columns):
R_W1 = 0                         # rows [0, 8)   : fc1 weight (in, out) in cols [0, 32)
R_B1 = R_W1 + IN_F               # row  8        : fc1 bias            in cols [0, 32)
R_W2 = R_B1 + 1                  # rows [9, 41)  : fc2 weight          in cols [0, 32)
R_B2 = R_W2 + HIDDEN             # row  41       : fc2 bias            in cols [0, 32)
R_W3 = R_B2 + 1                  # rows [42, 74) : fc3 weight          in cols [0, 56)
R_B3 = R_W3 + HIDDEN             # row  74       : fc3 bias            in cols [0, 56)
P_ROWS = R_B3 + 1                # 75
P_COLS = 128                     # lane-padded slab width


# ------------------------------ Pallas kernel ------------------------------
def mlp_kernel(x_ref, p_ref, out_ref):
    """Fully fused 3-layer MLP.

    x_ref  : (B, IN_F)        flattened input
    p_ref  : (P_ROWS, P_COLS) packed parameter slab (see row layout above)
    out_ref: (B, NUM_CLASSES) logits
    """
    x = x_ref[...]                                       # (B, 8)

    # Static slices into the packed slab: zero-cost views, no DMA.
    w1 = p_ref[R_W1:R_B1, 0:HIDDEN]                      # (8, 32)
    b1 = p_ref[R_B1:R_W2, 0:HIDDEN]                      # (1, 32)
    w2 = p_ref[R_W2:R_B2, 0:HIDDEN]                      # (32, 32)
    b2 = p_ref[R_B2:R_W3, 0:HIDDEN]                      # (1, 32)
    w3 = p_ref[R_W3:R_B3, 0:NUM_CLASSES]                 # (32, 56)
    b3 = p_ref[R_B3:P_ROWS, 0:NUM_CLASSES]               # (1, 56)

    h = jnp.dot(x, w1, preferred_element_type=jnp.float32) + b1
    h = jnp.maximum(h, 0.0)                              # relu(fc1); dropout = identity (eval)

    h = jnp.dot(h, w2, preferred_element_type=jnp.float32) + b2
    h = jnp.maximum(h, 0.0)                              # relu(fc2); dropout = identity (eval)

    out = jnp.dot(h, w3, preferred_element_type=jnp.float32) + b3
    out_ref[...] = out.astype(out_ref.dtype)             # single-vreg store


# ------------------------------ wrapper -------------------------------------
def linear_predictor_forward(x, packed_params):
    """x: (BATCH, SEQ) float32 -> (BATCH, NUM_CLASSES) float32."""
    B = x.shape[0]
    x2d = x.reshape(B, IN_F)

    vmem = pl.BlockSpec(memory_space=pltpu.MemorySpace.VMEM)
    flops = 2 * B * (IN_F * HIDDEN + HIDDEN * HIDDEN + HIDDEN * NUM_CLASSES)
    bytes_accessed = 4 * (B * IN_F + P_ROWS * P_COLS + B * NUM_CLASSES)

    return pl.pallas_call(
        mlp_kernel,
        out_shape=jax.ShapeDtypeStruct((B, NUM_CLASSES), jnp.float32),
        in_specs=[vmem, vmem],
        out_specs=vmem,
        cost_estimate=pl.CostEstimate(
            flops=flops, transcendentals=0, bytes_accessed=bytes_accessed),
    )(x2d, packed_params)


# ------------------------- deterministic parameters -------------------------
def make_raw_params(key):
    """PyTorch nn.Linear-style init: U(-1/sqrt(fan_in), 1/sqrt(fan_in))."""
    keys = jax.random.split(key, 6)

    def linear(kw, kb, fan_in, fan_out):
        bound = 1.0 / jnp.sqrt(jnp.float32(fan_in))
        w = jax.random.uniform(kw, (fan_out, fan_in),
                               minval=-bound, maxval=bound, dtype=jnp.float32)
        b = jax.random.uniform(kb, (fan_out,),
                               minval=-bound, maxval=bound, dtype=jnp.float32)
        return w, b

    w1, b1 = linear(keys[0], keys[1], IN_F, HIDDEN)
    w2, b2 = linear(keys[2], keys[3], HIDDEN, HIDDEN)
    w3, b3 = linear(keys[4], keys[5], HIDDEN, NUM_CLASSES)
    return (w1, b1, w2, b2, w3, b3)


def pack_params(raw):
    """Pack (torch-layout) params into one lane-padded (in,out)-layout slab."""
    w1, b1, w2, b2, w3, b3 = raw
    slab = jnp.zeros((P_ROWS, P_COLS), jnp.float32)
    slab = slab.at[R_W1:R_B1, :HIDDEN].set(w1.T)         # (8, 32)
    slab = slab.at[R_B1, :HIDDEN].set(b1)                # (32,)
    slab = slab.at[R_W2:R_B2, :HIDDEN].set(w2.T)         # (32, 32)
    slab = slab.at[R_B2, :HIDDEN].set(b2)                # (32,)
    slab = slab.at[R_W3:R_B3, :NUM_CLASSES].set(w3.T)    # (32, 56)
    slab = slab.at[R_B3, :NUM_CLASSES].set(b3)           # (56,)
    return slab


def reference_forward(x, raw):
    """Pure-JAX reference for the same (eval-mode) forward."""
    w1, b1, w2, b2, w3, b3 = raw
    h = jnp.maximum(x.reshape(x.shape[0], -1) @ w1.T + b1, 0.0)
    h = jnp.maximum(h @ w2.T + b2, 0.0)
    return h @ w3.T + b3


# ---------------------------------- main -------------------------------------
if __name__ == "__main__":
    key = jax.random.PRNGKey(0)
    k_x, k_p = jax.random.split(key)

    x = jax.random.normal(k_x, (BATCH, SEQ), dtype=jnp.float32)
    raw_params = make_raw_params(k_p)
    packed = pack_params(raw_params)

    out = linear_predictor_forward(x, packed)
    out = jax.block_until_ready(out)

    assert out.shape == (BATCH, NUM_CLASSES), out.shape
    assert jnp.all(jnp.isfinite(out))

    ref = reference_forward(x, raw_params)
    assert jnp.allclose(out, ref, atol=1e-5, rtol=1e-5), \
        float(jnp.max(jnp.abs(out - ref)))

    print("KERNEL_OK")
</pallas_src>

<mosaic_0001>
module attributes {stable_mosaic.version = 11 : i64} {
  func.func @mlp_kernel(%arg0: memref<2x8xf32, #tpu.memory_space<vmem>>, %arg1: memref<75x128xf32, #tpu.memory_space<vmem>>, %arg2: memref<2x56xf32, #tpu.memory_space<vmem>>) attributes {dimension_semantics = [], scalar_prefetch = 0 : i64, scratch_operands = 0 : i64, tpu.core_type = #tpu.core_type<tc>} {
    %c0 = arith.constant 0 : index
    %c0_0 = arith.constant 0 : index
    %0 = vector.load %arg0[%c0, %c0_0] : memref<2x8xf32, #tpu.memory_space<vmem>>, vector<2x8xf32>
    %c0_1 = arith.constant 0 : index
    %c0_2 = arith.constant 0 : index
    %1 = vector.load %arg1[%c0_1, %c0_2] : memref<75x128xf32, #tpu.memory_space<vmem>>, vector<8x32xf32>
    %c8 = arith.constant 8 : index
    %c0_3 = arith.constant 0 : index
    %2 = vector.load %arg1[%c8, %c0_3] : memref<75x128xf32, #tpu.memory_space<vmem>>, vector<1x32xf32>
    %c9 = arith.constant 9 : index
    %c0_4 = arith.constant 0 : index
    %3 = vector.load %arg1[%c9, %c0_4] : memref<75x128xf32, #tpu.memory_space<vmem>>, vector<32x32xf32>
    %c41 = arith.constant 41 : index
    %c0_5 = arith.constant 0 : index
    %4 = vector.load %arg1[%c41, %c0_5] : memref<75x128xf32, #tpu.memory_space<vmem>>, vector<1x32xf32>
    %c42 = arith.constant 42 : index
    %c0_6 = arith.constant 0 : index
    %5 = vector.load %arg1[%c42, %c0_6] : memref<75x128xf32, #tpu.memory_space<vmem>>, vector<32x56xf32>
    %c74 = arith.constant 74 : index
    %c0_7 = arith.constant 0 : index
    %6 = vector.load %arg1[%c74, %c0_7] : memref<75x128xf32, #tpu.memory_space<vmem>>, vector<1x56xf32>
    %cst = arith.constant dense<0.000000e+00> : vector<2x32xf32>
    %7 = tpu.matmul %0, %1, %cst {dimension_numbers = #tpu.dot_dimension_numbers<[1], [0], [0], [1], [0, 0, 1, 1], [], []>} : vector<2x8xf32>, vector<8x32xf32>, vector<2x32xf32> -> vector<2x32xf32>
    %8 = vector.broadcast %2 : vector<1x32xf32> to vector<2x32xf32>
    %9 = arith.addf %7, %8 : vector<2x32xf32>
    %cst_8 = arith.constant 0.000000e+00 : f32
    %10 = vector.broadcast %cst_8 : f32 to vector<2x32xf32>
    %11 = arith.maximumf %9, %10 : vector<2x32xf32>
    %cst_9 = arith.constant dense<0.000000e+00> : vector<2x32xf32>
    %12 = tpu.matmul %11, %3, %cst_9 {dimension_numbers = #tpu.dot_dimension_numbers<[1], [0], [0], [1], [0, 0, 1, 1], [], []>} : vector<2x32xf32>, vector<32x32xf32>, vector<2x32xf32> -> vector<2x32xf32>
    %13 = vector.broadcast %4 : vector<1x32xf32> to vector<2x32xf32>
    %14 = arith.addf %12, %13 : vector<2x32xf32>
    %cst_10 = arith.constant 0.000000e+00 : f32
    %15 = vector.broadcast %cst_10 : f32 to vector<2x32xf32>
    %16 = arith.maximumf %14, %15 : vector<2x32xf32>
    %cst_11 = arith.constant dense<0.000000e+00> : vector<2x56xf32>
    %17 = tpu.matmul %16, %5, %cst_11 {dimension_numbers = #tpu.dot_dimension_numbers<[1], [0], [0], [1], [0, 0, 1, 1], [], []>} : vector<2x32xf32>, vector<32x56xf32>, vector<2x56xf32> -> vector<2x56xf32>
    %18 = vector.broadcast %6 : vector<1x56xf32> to vector<2x56xf32>
    %19 = arith.addf %17, %18 : vector<2x56xf32>
    %c0_12 = arith.constant 0 : index
    %c0_13 = arith.constant 0 : index
    %20 = vector.load %arg2[%c0_12, %c0_13] : memref<2x56xf32, #tpu.memory_space<vmem>>, vector<2x56xf32>
    tpu.vector_store %arg2[%c0_12, %c0_13], %19 {strides = array<i32>} : memref<2x56xf32, #tpu.memory_space<vmem>>, vector<2x56xf32>,
    return
  }
}

</mosaic_0001>

<llo_original>
// kernel: tpu_custom_call.1
$region0: #{tpu_custom_call.1}
  #allocation0 [shape = 'u32[]', space=smem, size = 0x4, offset = 0x4, fixed_abs, tag = 'smem constant byte address 0x4 - core index']
  #allocation1 [shape = 'u32[72,128]{1,0:T(1,128)}', space=vmem, size = 0x9000, scoped, tag = 'internal scratch']
  %s0 = inlined_call_operand.hbm [shape: f32[2,8], index: 0, kind: input, shape index: {}]
  %s1 = inlined_call_operand.hbm [shape: f32[75,128], index: 1, kind: input, shape index: {}]
  %s2 = inlined_call_operand.hbm [shape: f32[2,56], index: 2, kind: output, shape index: {}]
  %s3 = sld [smem:[#allocation0]]
  $region26: #{tpu_custom_call.1} parent=0
    _
  %s5 = ssub.s32 1, %s3
  %s6 = scalar_select 0, %s5, %s3
  $region1: #{tpu_custom_call.1} parent=0
    #allocation2 [shape = 'u8[1024]{0}', space=vmem, size = 0x400, scoped, tag = 'input window, operand 0, single buffered']
    #allocation3 [shape = 's32[1]{0}', space=sflag, size = 0x4, scoped, tag = 'scoped memory for tpu_custom_call.1']
    #allocation4 [shape = 's32[1]{0}', space=sflag, size = 0x4, scoped, tag = 'scoped memory for tpu_custom_call.1']
    #allocation5 [shape = 'u8[40960]{0}', space=vmem, size = 0xa000, scoped, tag = 'input window, operand 1, single buffered']
    #allocation6 [shape = 's32[1]{0}', space=sflag, size = 0x4, scoped, tag = 'scoped memory for tpu_custom_call.1']
    #allocation7 [shape = 'u8[1024]{0}', space=vmem, size = 0x400, scoped, tag = 'output window, operand 0, single buffered']
    %7 = vsyncpa [#allocation3], 0
    %8 = vsyncpa [#allocation6], 0
    %9 = vsyncpa [#allocation4], 0
    // Predicated region
    $region2: #{tpu_custom_call.1} parent=1 // pred_check
      _
    $region3: #{tpu_custom_call.1} parent=1 // pred_check_branch
      %11 = sbr.rel (0) target = $region5
    $region4: #{tpu_custom_call.1} parent=1 // pred_region
      %13 = vsyncadd [#allocation3], 0
      %s15 = sshll.u32 %s0, 4
      %s16 = int_to_ptr.hbm [resolvable:$true] %s15
      %s17 = sshll.u32 [#allocation2], 4
      %s18 = int_to_ptr.vmem [resolvable:$true] %s17
      %20 = dma.hbm_to_vmem [thread:$0]  %s16, 32, %s18, [#allocation3]
    $region5: #{tpu_custom_call.1} parent=1 // pred_fallthru
      _
    // Predicated region
    $region6: #{tpu_custom_call.1} parent=1 // pred_check
      _
    $region7: #{tpu_custom_call.1} parent=1 // pred_check_branch
      %22 = sbr.rel (0) target = $region9
    $region8: #{tpu_custom_call.1} parent=1 // pred_region
      %24 = vsyncadd [#allocation6], 0
      %s25 = sshll.u32 %s1, 4
      %s26 = int_to_ptr.hbm [resolvable:$true] %s25
      %s27 = sshll.u32 [#allocation5], 4
      %s28 = int_to_ptr.vmem [resolvable:$true] %s27
      %33 = dma.hbm_to_vmem [thread:$0]  %s26, 1280, %s28, [#allocation6], 128, 128, 8
    $region9: #{tpu_custom_call.1} parent=1 // pred_fallthru
      _
    // Predicated region
    $region10: #{tpu_custom_call.1} parent=1 // pred_check
      _
    $region11: #{tpu_custom_call.1} parent=1 // pred_check_branch
      %35 = sbr.rel (0) target = $region13
    $region12: #{tpu_custom_call.1} parent=1 // pred_region
      %37 = dma.done [#allocation3], 32
    $region13: #{tpu_custom_call.1} parent=1 // pred_fallthru
      _
    // Predicated region
    $region14: #{tpu_custom_call.1} parent=1 // pred_check
      _
    $region15: #{tpu_custom_call.1} parent=1 // pred_check_branch
      %39 = sbr.rel (0) target = $region17
    $region16: #{tpu_custom_call.1} parent=1 // pred_region
      %41 = dma.done [#allocation6], 1280
    $region17: #{tpu_custom_call.1} parent=1 // pred_fallthru
      _
    %v42 = vld [vmem:[#allocation2] sm:$0x3]
    %v43 = vld [vmem:[#allocation5] sm:$0xff]
    %v44 = vld [vmem:[#allocation5 + $0x8] sm:$0x1]
    %v45 = vld [vmem:[#allocation5 + $0x9] sm:$0xff]
    %v46 = vld [vmem:[#allocation5 + $0x11] sm:$0xff]
    %v47 = vld [vmem:[#allocation5 + $0x19] sm:$0xff]
    %v48 = vld [vmem:[#allocation5 + $0x21] sm:$0xff]
    %v49 = vld [vmem:[#allocation5 + $0x29] sm:$0x1]
    %v50 = vld [vmem:[#allocation5 + $0x2a] sm:$0xff]
    %v51 = vld [vmem:[#allocation5 + $0x32] sm:$0xff]
    %v52 = vld [vmem:[#allocation5 + $0x3a] sm:$0xff]
    %v53 = vld [vmem:[#allocation5 + $0x42] sm:$0xff]
    %v54 = vld [vmem:[#allocation5 + $0x4a] sm:$0x1]
    %v55 = vperm.slane %v44, 0
    %vm56 = vcmask 64512
    %v58 = vsel %vm56, %v42, 0
    %60 = vmatpush.msra.mxu0 0.0
    %61 = vmatpush.msra.mxu0 0.0
    %62 = vmatpush.msra.mxu0 0.0
    %63 = vmatpush.msra.mxu0 0.0
    %64 = vmatpush.msra.mxu0 0.0
    %65 = vmatpush.msra.mxu0 0.0
    %66 = vmatpush.msra.mxu0 0.0
    %67 = vmatpush.msra.mxu0 0.0
    %68 = vmatpush.msra.mxu0 0.0
    %69 = vmatpush.msra.mxu0 0.0
    %70 = vmatpush.msra.mxu0 0.0
    %71 = vmatpush.msra.mxu0 0.0
    %72 = vmatpush.msra.mxu0 0.0
    %73 = vmatpush.msra.mxu0 0.0
    %74 = vmatpush.msra.mxu0 0.0
    %75 = vmatpush.msra.mxu0 %v43
    %76 = vmatmul.f32.gmra.mxu0 %v58
    %v77 = vpop.f32.mrf.mxu0
    %v78 = vadd.f32 %v55, %v77
    %79 = vdwg.mxu0
    %v80 = vmax.f32 %v78, 0.0
    %v81 = vperm.slane %v49, 0
    %vm82 = vcmask 261120
    %v84 = vsel %vm82, %v80, 0
    %86 = vmatpush.msra.mxu0 0.0
    %87 = vmatpush.msra.mxu0 0.0
    %88 = vmatpush.msra.mxu0 0.0
    %89 = vmatpush.msra.mxu0 0.0
    %90 = vmatpush.msra.mxu0 0.0
    %91 = vmatpush.msra.mxu0 0.0
    %92 = vmatpush.msra.mxu0 0.0
    %93 = vmatpush.msra.mxu0 0.0
    %94 = vmatpush.msra.mxu0 0.0
    %95 = vmatpush.msra.mxu0 0.0
    %96 = vmatpush.msra.mxu0 0.0
    %97 = vmatpush.msra.mxu0 0.0
    %98 = vmatpush.msra.mxu0 %v48
    %99 = vmatpush.msra.mxu0 %v47
    %100 = vmatpush.msra.mxu0 %v46
    %101 = vmatpush.msra.mxu0 %v45
    %102 = vmatmul.f32.gmra.mxu0 %v84
    %v103 = vpop.f32.mrf.mxu0
    %v104 = vadd.f32 %v81, %v103
    %105 = vdwg.mxu0
    %v106 = vmax.f32 %v104, 0.0
    %v107 = vperm.slane %v54, 0
    %v109 = vsel %vm82, %v106, 0
    %111 = vmatpush.msra.mxu0 0.0
    %112 = vmatpush.msra.mxu0 0.0
    %113 = vmatpush.msra.mxu0 0.0
    %114 = vmatpush.msra.mxu0 0.0
    %115 = vmatpush.msra.mxu0 0.0
    %116 = vmatpush.msra.mxu0 0.0
    %117 = vmatpush.msra.mxu0 0.0
    %118 = vmatpush.msra.mxu0 0.0
    %119 = vmatpush.msra.mxu0 0.0
    %120 = vmatpush.msra.mxu0 0.0
    %121 = vmatpush.msra.mxu0 0.0
    %122 = vmatpush.msra.mxu0 0.0
    %123 = vmatpush.msra.mxu0 %v53
    %124 = vmatpush.msra.mxu0 %v52
    %125 = vmatpush.msra.mxu0 %v51
    %126 = vmatpush.msra.mxu0 %v50
    %127 = vmatmul.f32.gmra.mxu0 %v109
    %v128 = vpop.f32.mrf.mxu0
    %v129 = vadd.f32 %v107, %v128
    %130 = vdwg.mxu0
    %vm131 = vcmask 451584
    %132 = vst.msk [vmem:[#allocation7] sm:$0x3] %vm131, %v129
    // Predicated region
    $region18: #{tpu_custom_call.1} parent=1 // pred_check
      _
    $region19: #{tpu_custom_call.1} parent=1 // pred_check_branch
      %134 = sbr.rel (0) target = $region21
    $region20: #{tpu_custom_call.1} parent=1 // pred_region
      %136 = vsyncadd [#allocation4], 0
      %s138 = sshll.u32 [#allocation7], 4
      %s139 = int_to_ptr.vmem [resolvable:$true] %s138
      %s140 = sshll.u32 %s2, 4
      %s141 = int_to_ptr.hbm [resolvable:$true] %s140
      %143 = dma.vmem_to_hbm [thread:$0]  %s139, 32, %s141, [#allocation4]
    $region21: #{tpu_custom_call.1} parent=1 // pred_fallthru
      _
    // Predicated region
    $region22: #{tpu_custom_call.1} parent=1 // pred_check
      _
    $region23: #{tpu_custom_call.1} parent=1 // pred_check_branch
      %145 = sbr.rel (0) target = $region25
    $region24: #{tpu_custom_call.1} parent=1 // pred_region
      %147 = dma.done [#allocation4], 32
    $region25: #{tpu_custom_call.1} parent=1 // pred_fallthru
      _
    %148 = vsyncpa [#allocation3], 1
    %149 = vsyncpa [#allocation6], 1
    %150 = vsyncpa [#allocation4], 1

</llo_original>
